<compile_context>
chip_gen: v7x
topology: tpu7x:2x2x1
jax: 0.10.0
libtpu: 0.0.40
codegen_flags: <defaults>
</compile_context>

<pallas_src>
import functools

import jax
import jax.numpy as jnp
from jax import lax
from jax.experimental import pallas as pl
from jax.experimental.pallas import tpu as pltpu


def _conv_bn_relu_pool_kernel(x_ref, w_ref, shift_ref, o_ref, *, Nb, H, W, Cp, Cout):
    # x_ref:     (Nb, 2, H*Wo, Kp) bf16  im2col patches, column-parity on a major axis
    # w_ref:     (Kp, Cp)          bf16  3x3 taps flattened into K=9*Cin (zero-padded), BN scale folded
    # shift_ref: (1, Cp)           f32   beta + (bias - running_mean) * scale (0 in padded lanes)
    # o_ref:     (Nb, Ho, Wo, Cout) f32
    Ho, Wo = H // 2, W // 2
    Kp = w_ref.shape[0]
    M = Nb * 2 * H * Wo

    # One MXU push for the whole block (M >= 256 rows); f32 accumulation.
    lhs = x_ref[...].reshape(M, Kp)                               # free major-axis merge
    acc = jnp.dot(lhs, w_ref[...], preferred_element_type=jnp.float32)   # (M, Cp)

    # 2x2 max pool of the pre-activation (exact: +shift and ReLU are monotone, applied after).
    acc = acc.reshape(Nb, 2, H * Wo, Cp)
    m = jnp.max(acc, axis=1)                                      # width pool  (major-axis reduce)
    m = m.reshape(Nb * Ho, 2, Wo, Cp)                             # tile-aligned (Wo = sublane tile)
    m = jnp.max(m, axis=1)                                        # height pool (major-axis reduce)

    y = jnp.maximum(m + shift_ref[...], 0.0)                      # folded conv-bias + BN + ReLU
    # Store only the real channels: 16x fewer writeback bytes than a 128-lane padded f32 store.
    o_ref[...] = y[..., :Cout].reshape(Nb, Ho, Wo, Cout).astype(o_ref.dtype)


def basic_conv_block(x_nchw, w, b, gamma, beta, running_mean, running_var, eps=1e-5):
    """Conv2d(3x3,'same') -> BatchNorm2d(eval) -> ReLU -> MaxPool2d(2,2). NCHW in / NCHW out."""
    N, Cin, H, W = x_nchw.shape
    Cout = w.shape[0]
    assert H % 2 == 0 and W % 2 == 0, "MaxPool2d(2,2) path requires even spatial dims"
    K = 9 * Cin
    Kp = ((K + 15) // 16) * 16                        # bf16-sublane-aligned contraction length
    Cp = max(128, ((Cout + 127) // 128) * 128)        # lane-dense matmul N dim (MXU/VPU side only)
    Ho, Wo = H // 2, W // 2

    # ---- wrapper-side glue (plain JAX): layout, im2col, parameter folding, padding ----
    # bf16 *before* the 9x im2col chain halves bytes through every intermediate pass.
    x = jnp.transpose(x_nchw, (0, 2, 3, 1)).astype(jnp.bfloat16)          # NHWC bf16
    xp = jnp.pad(x, ((0, 0), (1, 1), (1, 1), (0, 0)))                     # 'same' padding for 3x3
    # 9-tap im2col; channel order (dy, dx, ci) matches the flattened weight order below.
    pats = [xp[:, dy:dy + H, dx:dx + W, :] for dy in range(3) for dx in range(3)]
    x_im = jnp.concatenate(pats, axis=-1)                                  # (N, H, W, 9*Cin)
    # Split output columns by parity so the pool's width pairs live on a major axis.
    x_im = x_im.reshape(N, H, Wo, 2, K)
    x_im = jnp.transpose(x_im, (0, 3, 1, 2, 4)).reshape(N, 2, H * Wo, K)
    if Kp != K:
        x_im = jnp.pad(x_im, ((0, 0), (0, 0), (0, 0), (0, Kp - K)))        # zero-fill padded taps

    scale = gamma / jnp.sqrt(running_var + eps)                            # BN -> scale/shift
    wk = jnp.transpose(w, (2, 3, 1, 0)).reshape(K, Cout)                   # row = (dy*3+dx)*Cin + ci
    wk = wk * scale[None, :]                                               # fold BN scale into weights
    wk = jnp.pad(wk, ((0, Kp - K), (0, Cp - Cout))).astype(jnp.bfloat16)
    shift = beta + (b - running_mean) * scale                              # fold conv bias + BN shift
    shift = jnp.pad(shift, (0, Cp - Cout)).reshape(1, Cp).astype(jnp.float32)

    # Grid: a balanced 2-way "parallel" axis when N is even (one step per v7x TensorCore); the
    # rest of the batch is folded into the matmul M dim so M = Nb*2*H*Wo >= 256 fills the MXU and
    # single-TC parts (v5e/v6e) see at most 2 grid steps of fixed overhead.
    if N % 2 == 0:
        grid_n, Nb = 2, N // 2
    else:
        grid_n, Nb = N, 1

    kernel = functools.partial(_conv_bn_relu_pool_kernel,
                               Nb=Nb, H=H, W=W, Cp=Cp, Cout=Cout)
    out = pl.pallas_call(
        kernel,
        out_shape=jax.ShapeDtypeStruct((N, Ho, Wo, Cout), jnp.float32),
        grid_spec=pltpu.PrefetchScalarGridSpec(
            num_scalar_prefetch=0,
            grid=(grid_n,),
            in_specs=[
                pl.BlockSpec((Nb, 2, H * Wo, Kp), lambda n: (n, 0, 0, 0)),
                pl.BlockSpec((Kp, Cp), lambda n: (0, 0)),
                pl.BlockSpec((1, Cp), lambda n: (0, 0)),
            ],
            out_specs=pl.BlockSpec((Nb, Ho, Wo, Cout), lambda n: (n, 0, 0, 0)),
        ),
        compiler_params=pltpu.CompilerParams(dimension_semantics=("parallel",)),
    )(x_im, wk, shift)

    return jnp.transpose(out, (0, 3, 1, 2))                                # NHWC -> NCHW


if __name__ == "__main__":
    key = jax.random.PRNGKey(0)
    kx, kw, kb, kg, kbe, km, kv = jax.random.split(key, 7)

    N, Cin, H, W = 2, 4, 16, 16
    Cout = 8
    eps = 1e-5

    x = jax.random.normal(kx, (N, Cin, H, W), jnp.float32)
    w = jax.random.normal(kw, (Cout, Cin, 3, 3), jnp.float32) * 0.1
    b = jax.random.normal(kb, (Cout,), jnp.float32) * 0.1
    gamma = 1.0 + 0.1 * jax.random.normal(kg, (Cout,), jnp.float32)
    beta = 0.1 * jax.random.normal(kbe, (Cout,), jnp.float32)
    running_mean = 0.1 * jax.random.normal(km, (Cout,), jnp.float32)
    running_var = jax.random.uniform(kv, (Cout,), jnp.float32, minval=0.5, maxval=1.5)

    out = basic_conv_block(x, w, b, gamma, beta, running_mean, running_var, eps)
    out = jax.block_until_ready(out)

    # Pure-JAX f32 reference (spec semantics) for correctness check.
    conv = lax.conv_general_dilated(
        x, w, window_strides=(1, 1), padding="SAME",
        dimension_numbers=("NCHW", "OIHW", "NCHW")) + b[None, :, None, None]
    bn = (conv - running_mean[None, :, None, None]) / jnp.sqrt(
        running_var[None, :, None, None] + eps) * gamma[None, :, None, None] + beta[None, :, None, None]
    act = jnp.maximum(bn, 0.0)
    ref = lax.reduce_window(act, -jnp.inf, lax.max,
                            window_dimensions=(1, 1, 2, 2),
                            window_strides=(1, 1, 2, 2), padding="VALID")

    assert out.shape == ref.shape, (out.shape, ref.shape)
    # Tolerance sized for bf16 inputs/weights with f32 accumulation.
    assert jnp.allclose(out, ref, atol=3e-2, rtol=3e-2), float(jnp.max(jnp.abs(out - ref)))
    print("KERNEL_OK")
</pallas_src>

<mosaic_0001>
module attributes {stable_mosaic.version = 11 : i64} {
  func.func @_conv_bn_relu_pool_kernel(%arg0: i32, %arg1: memref<1x2x128x48xbf16, #tpu.memory_space<vmem>>, %arg2: memref<48x128xbf16, #tpu.memory_space<vmem>>, %arg3: memref<1x128xf32, #tpu.memory_space<vmem>>, %arg4: memref<1x8x8x8xf32, #tpu.memory_space<vmem>>) attributes {dimension_semantics = [#tpu.dimension_semantics<parallel>], iteration_bounds = array<i64: 2>, scalar_prefetch = 0 : i64, scratch_operands = 0 : i64, tpu.core_type = #tpu.core_type<tc>, window_params = [{transform_indices = @transform_0, window_bounds = array<i64: 1, 2, 128, 48>}, {pipeline_mode = #tpu.pipeline_mode<synchronous>, transform_indices = @transform_1, window_bounds = array<i64: 48, 128>}, {pipeline_mode = #tpu.pipeline_mode<synchronous>, transform_indices = @transform_2, window_bounds = array<i64: 1, 128>}, {transform_indices = @transform_3, window_bounds = array<i64: 1, 8, 8, 8>}]} {
    %c0 = arith.constant 0 : index
    %c0_0 = arith.constant 0 : index
    %c0_1 = arith.constant 0 : index
    %c0_2 = arith.constant 0 : index
    %0 = vector.load %arg1[%c0, %c0_0, %c0_1, %c0_2] : memref<1x2x128x48xbf16, #tpu.memory_space<vmem>>, vector<1x2x128x48xbf16>
    %1 = vector.shape_cast %0 : vector<1x2x128x48xbf16> to vector<256x48xbf16>
    %c0_3 = arith.constant 0 : index
    %c0_4 = arith.constant 0 : index
    %2 = vector.load %arg2[%c0_3, %c0_4] : memref<48x128xbf16, #tpu.memory_space<vmem>>, vector<48x128xbf16>
    %cst = arith.constant dense<0.000000e+00> : vector<256x128xf32>
    %3 = tpu.matmul %1, %2, %cst {dimension_numbers = #tpu.dot_dimension_numbers<[1], [0], [0], [1], [0, 0, 1, 1], [], []>} : vector<256x48xbf16>, vector<48x128xbf16>, vector<256x128xf32> -> vector<256x128xf32>
    %4 = vector.shape_cast %3 : vector<256x128xf32> to vector<1x2x128x128xf32>
    %cst_5 = arith.constant dense<0xFF800000> : vector<1x128x128xf32>
    %5 = vector.multi_reduction <maximumf>, %4, %cst_5 [1] : vector<1x2x128x128xf32> to vector<1x128x128xf32>
    %6 = vector.shape_cast %5 : vector<1x128x128xf32> to vector<8x2x8x128xf32>
    %cst_6 = arith.constant dense<0xFF800000> : vector<8x8x128xf32>
    %7 = vector.multi_reduction <maximumf>, %6, %cst_6 [1] : vector<8x2x8x128xf32> to vector<8x8x128xf32>
    %c0_7 = arith.constant 0 : index
    %c0_8 = arith.constant 0 : index
    %8 = vector.load %arg3[%c0_7, %c0_8] : memref<1x128xf32, #tpu.memory_space<vmem>>, vector<1x128xf32>
    %9 = vector.shape_cast %8 : vector<1x128xf32> to vector<1x1x128xf32>
    %10 = vector.broadcast %9 : vector<1x1x128xf32> to vector<8x8x128xf32>
    %11 = arith.addf %7, %10 : vector<8x8x128xf32>
    %cst_9 = arith.constant 0.000000e+00 : f32
    %12 = vector.broadcast %cst_9 : f32 to vector<8x8x128xf32>
    %13 = arith.maximumf %11, %12 : vector<8x8x128xf32>
    %14 = vector.extract_strided_slice %13 {offsets = [0, 0, 0], sizes = [8, 8, 8], strides = [1, 1, 1]} : vector<8x8x128xf32> to vector<8x8x8xf32>
    %15 = vector.shape_cast %14 : vector<8x8x8xf32> to vector<1x8x8x8xf32>
    %c0_10 = arith.constant 0 : index
    %c0_11 = arith.constant 0 : index
    %c0_12 = arith.constant 0 : index
    %c0_13 = arith.constant 0 : index
    %16 = vector.load %arg4[%c0_10, %c0_11, %c0_12, %c0_13] : memref<1x8x8x8xf32, #tpu.memory_space<vmem>>, vector<1x8x8x8xf32>
    tpu.vector_store %arg4[%c0_10, %c0_11, %c0_12, %c0_13], %15 {strides = array<i32>} : memref<1x8x8x8xf32, #tpu.memory_space<vmem>>, vector<1x8x8x8xf32>,
    return
  }
  func.func @transform_0(%arg0: i32) -> (i32, i32, i32, i32) {
    %c0_i32 = arith.constant 0 : i32
    %c0_i32_0 = arith.constant 0 : i32
    %c0_i32_1 = arith.constant 0 : i32
    %c0_i32_2 = arith.constant 0 : i32
    return %arg0, %c0_i32, %c0_i32_0, %c0_i32_1 : i32, i32, i32, i32
  }
  func.func @transform_1(%arg0: i32) -> (i32, i32) {
    %c0_i32 = arith.constant 0 : i32
    %c0_i32_0 = arith.constant 0 : i32
    %c0_i32_1 = arith.constant 0 : i32
    return %c0_i32, %c0_i32_0 : i32, i32
  }
  func.func @transform_2(%arg0: i32) -> (i32, i32) {
    %c0_i32 = arith.constant 0 : i32
    %c0_i32_0 = arith.constant 0 : i32
    %c0_i32_1 = arith.constant 0 : i32
    return %c0_i32, %c0_i32_0 : i32, i32
  }
  func.func @transform_3(%arg0: i32) -> (i32, i32, i32, i32) {
    %c0_i32 = arith.constant 0 : i32
    %c0_i32_0 = arith.constant 0 : i32
    %c0_i32_1 = arith.constant 0 : i32
    %c0_i32_2 = arith.constant 0 : i32
    return %arg0, %c0_i32, %c0_i32_0, %c0_i32_1 : i32, i32, i32, i32
  }
}

</mosaic_0001>

<llo_original>
// kernel: tpu_custom_call.1
$region0: #{tpu_custom_call.1}
  #allocation0 [shape = 'u32[]', space=smem, size = 0x4, offset = 0x4, fixed_abs, tag = 'smem constant byte address 0x4 - core index']
  #allocation1 [shape = 'u32[144,128]{1,0:T(1,128)}', space=vmem, size = 0x12000, scoped, tag = 'internal scratch']
  %s0 = inlined_call_operand.vmem [shape: bf16[2,2,128,48], index: 0, kind: input, shape index: {}]
  %s1 = inlined_call_operand.vmem [shape: bf16[48,128], index: 1, kind: input, shape index: {}]
  %s2 = inlined_call_operand.vmem [shape: f32[1,128], index: 2, kind: input, shape index: {}]
  %s3 = inlined_call_operand.hbm [shape: f32[2,8,8,8], index: 3, kind: output, shape index: {}]
  %s4 = sld [smem:[#allocation0]]
  $region45: #{tpu_custom_call.1} parent=0
    _
  %s6 = ssub.s32 1, %s4
  %s7 = scalar_select 0, %s6, %s4
  $region1: #{tpu_custom_call.1} parent=0
    #allocation2 [shape = 'u8[65536]{0}', space=vmem, size = 0x10000, scoped, tag = 'output window, operand 0']
    #allocation3 [shape = 's32[2]{0}', space=sflag, size = 0x8, scoped, tag = 'scoped memory for tpu_custom_call.1']
    %8 = vsyncpa [#allocation3], 0
    %s9 = scalar_lea.sflag [#allocation3], 1
    %10 = vsyncpa %s9, 0
    loop: start=0, step=1, limit=4
    $region2: #{tpu_custom_call.1} parent=1 // loop_pre_header
      _
    $region3: #{tpu_custom_call.1} parent=1 // loop_header
      %s12 = sphi 0, %s16
      %p13 = scmp.ge.s32.totalorder %s12, 4
      %s22 = sphi 0, %s24
      %s25 = sphi 0, %s22
      %s26 = sphi 0, %s25
      %s42 = sphi 0, %s26
      %s46 = sphi 0, %s46
      %s48 = sphi 0, %s46
      %s49 = sphi 0, %s48
      %s63 = sphi 0, %s49
      %s67 = sphi 0, %s67
      %s69 = sphi 0, %s67
      %s70 = sphi 0, %s69
      %s84 = sphi 0, %s70
      %s90 = sphi 0, %s92
      %s93 = sphi 0, %s90
      %s94 = sphi 0, %s93
      %s110 = sphi 0, %s94
    $region4: #{tpu_custom_call.1} parent=1 // loop_header_branch
      %15 = sbr.rel (%p13) target = $region8
    $region5: #{tpu_custom_call.1} parent=1 // loop_body
      %s17 = ssub.s32 %s12, 1
      %s18 = ssub.s32 %s12, 2
      %s19 = sadd.s32 %s12, 1
      %s20 = ssub.s32 %s12, %s19
      %p21 = scmp.eq.s32.totalorder %s20, 0
      %s23 = sadd.s32 %s22, 1
      %s24 = scalar_select %p21, %s22, %s23
      %p27 = pneg %p21
      %p28 = scmp.eq.s32.totalorder %s12, 1
      %p29 = por %p27, %p28
      %p30 = scmp.ne.s32.totalorder %s22, %s25
      %p31 = scmp.eq.s32.totalorder %s12, 0
      %p32 = por %p30, %p31
      %p33 = scmp.ne.s32.totalorder %s22, %s25
      %p34 = scmp.eq.s32.totalorder %s17, 1
      %p35 = por %p33, %p34
      %p36 = scmp.ne.s32.totalorder %s25, %s26
      %p37 = scmp.eq.s32.totalorder %s17, 0
      %p38 = por %p36, %p37
      %p39 = scmp.ne.s32.totalorder %s25, %s26
      %p40 = scmp.eq.s32.totalorder %s18, 1
      %p41 = por %p39, %p40
      %p43 = scmp.ne.s32.totalorder %s26, %s42
      %p44 = scmp.eq.s32.totalorder %s18, 0
      %p45 = por %p43, %p44
      %s47 = sadd.s32 %s46, 1
      %p50 = scmp.eq.s32.totalorder %s12, 1
      %p51 = scmp.ne.s32.totalorder %s46, %s48
      %p52 = scmp.eq.s32.totalorder %s12, 0
      %p53 = por %p51, %p52
      %p54 = scmp.ne.s32.totalorder %s46, %s48
      %p55 = scmp.eq.s32.totalorder %s17, 1
      %p56 = por %p54, %p55
      %p57 = scmp.ne.s32.totalorder %s48, %s49
      %p58 = scmp.eq.s32.totalorder %s17, 0
      %p59 = por %p57, %p58
      %p60 = scmp.ne.s32.totalorder %s48, %s49
      %p61 = scmp.eq.s32.totalorder %s18, 1
      %p62 = por %p60, %p61
      %p64 = scmp.ne.s32.totalorder %s49, %s63
      %p65 = scmp.eq.s32.totalorder %s18, 0
      %p66 = por %p64, %p65
      %s68 = sadd.s32 %s67, 1
      %p71 = scmp.eq.s32.totalorder %s12, 1
      %p72 = scmp.ne.s32.totalorder %s67, %s69
      %p73 = scmp.eq.s32.totalorder %s12, 0
      %p74 = por %p72, %p73
      %p75 = scmp.ne.s32.totalorder %s67, %s69
      %p76 = scmp.eq.s32.totalorder %s17, 1
      %p77 = por %p75, %p76
      %p78 = scmp.ne.s32.totalorder %s69, %s70
      %p79 = scmp.eq.s32.totalorder %s17, 0
      %p80 = por %p78, %p79
      %p81 = scmp.ne.s32.totalorder %s69, %s70
      %p82 = scmp.eq.s32.totalorder %s18, 1
      %p83 = por %p81, %p82
      %p85 = scmp.ne.s32.totalorder %s70, %s84
      %p86 = scmp.eq.s32.totalorder %s18, 0
      %p87 = por %p85, %p86
      %s88 = ssub.s32 %s12, %s19
      %p89 = scmp.eq.s32.totalorder %s88, 0
      %s91 = sadd.s32 %s90, 1
      %s92 = scalar_select %p89, %s90, %s91
      %p95 = pneg %p89
      %p96 = scmp.eq.s32.totalorder %s12, 1
      %p97 = por %p95, %p96
      %p98 = scmp.ne.s32.totalorder %s90, %s93
      %p99 = scmp.eq.s32.totalorder %s12, 0
      %p100 = por %p98, %p99
      %p101 = scmp.ne.s32.totalorder %s90, %s93
      %p102 = scmp.eq.s32.totalorder %s17, 1
      %p103 = por %p101, %p102
      %p104 = scmp.ne.s32.totalorder %s93, %s94
      %p105 = scmp.eq.s32.totalorder %s17, 0
      %p106 = por %p104, %p105
      %p107 = scmp.ne.s32.totalorder %s93, %s94
      %p108 = scmp.eq.s32.totalorder %s18, 1
      %p109 = por %p107, %p108
      %p111 = scmp.ne.s32.totalorder %s94, %s110
      %p112 = scmp.eq.s32.totalorder %s18, 0
      %p113 = por %p111, %p112
      %p114 = scmp.le.s32.totalorder 1, %s12
      %p115 = scmp.lt.s32.totalorder %s12, 3
      %p116 = pnand %p114, %p115
      %p117 = pneg %p116
      // Predicated region
      $region9: #{tpu_custom_call.1} parent=5 // pred_check
        _
      $region10: #{tpu_custom_call.1} parent=5 // pred_check_branch
        %119 = sbr.rel (%p116) target = $region12
      $region11: #{tpu_custom_call.1} parent=5 // pred_region
        %s120 = ssub.s32 %s12, 1
        // Predicated region
        $region13: #{tpu_custom_call.1} parent=11 // pred_check
          %p121 = pneg %p59
        $region14: #{tpu_custom_call.1} parent=11 // pred_check_branch
          %123 = sbr.rel (%p121) target = $region16
        $region15: #{tpu_custom_call.1} parent=11 // pred_region
          _
        $region16: #{tpu_custom_call.1} parent=11 // pred_fallthru
          _
        // Predicated region
        $region17: #{tpu_custom_call.1} parent=11 // pred_check
          %p124 = pneg %p80
        $region18: #{tpu_custom_call.1} parent=11 // pred_check_branch
          %126 = sbr.rel (%p124) target = $region20
        $region19: #{tpu_custom_call.1} parent=11 // pred_region
          _
        $region20: #{tpu_custom_call.1} parent=11 // pred_fallthru
          _
      $region12: #{tpu_custom_call.1} parent=5 // pred_fallthru
        _
      %p127 = scmp.lt.s32.totalorder %s12, 2
      // Predicated region
      $region21: #{tpu_custom_call.1} parent=5 // pred_check
        %p128 = pneg %p127
      $region22: #{tpu_custom_call.1} parent=5 // pred_check_branch
        %130 = sbr.rel (%p128) target = $region24
      $region23: #{tpu_custom_call.1} parent=5 // pred_region
        // Predicated region
        $region25: #{tpu_custom_call.1} parent=23 // pred_check
          %p131 = pneg %p32
        $region26: #{tpu_custom_call.1} parent=23 // pred_check_branch
          %133 = sbr.rel (%p131) target = $region28
        $region27: #{tpu_custom_call.1} parent=23 // pred_region
          %p134 = scmp.lt.s32.totalorder %s12, 1
          %s135 = scalar_select %p134, %s12, 1
          %s136 = smul.addr %s135, 32
          %s137 = smul.addr %s136, 4
          %s138 = scalar_lea.vmem %s0, %s137
        $region28: #{tpu_custom_call.1} parent=23 // pred_fallthru
          _
      $region24: #{tpu_custom_call.1} parent=5 // pred_fallthru
        _
      %p139 = scmp.le.s32.totalorder 1, %s12
      %p140 = scmp.lt.s32.totalorder %s12, 3
      %p141 = pnand %p139, %p140
      %p142 = pneg %p141
      // Predicated region
      $region29: #{tpu_custom_call.1} parent=5 // pred_check
        _
      $region30: #{tpu_custom_call.1} parent=5 // pred_check_branch
        %144 = sbr.rel (%p141) target = $region32
      $region31: #{tpu_custom_call.1} parent=5 // pred_region
        %s145 = ssub.s32 %s12, 1
        %p146 = scmp.lt.s32.totalorder %s17, 1
        %s147 = scalar_select %p146, %s17, 1
        %s148 = smul.addr %s147, 32
        %s149 = smul.addr %s148, 4
        %s150 = scalar_lea.vmem %s0, %s149
        %p151 = pneg %p38
        %p152 = pneg %p35
        %p153 = pneg %p59
        %p154 = pneg %p56
        %p155 = pneg %p80
        %p156 = pneg %p77
        %p157 = pneg %p106
        %p158 = pneg %p103
        %s159 = sand.u32 %s93, 1
        %s160 = scalar_lea.sflag [#allocation3], %s159
        %s161 = sand.u32 %s93, 1
        %s162 = smul.addr %s161, 64
        %s163 = scalar_lea.vmem [#allocation2], %s162
        %p164 = scmp.lt.s32.totalorder %s17, 1
        %s165 = scalar_select %p164, %s17, 1
        %s166 = smul.addr %s165, 32
        %s167 = smul.addr %s166, 4
        %s168 = scalar_lea.vmem %s0, %s167
        %v170 = vld [vmem:[%s168] sm:$0xf]
        %v171 = vld [vmem:[%s168 + $0x4] sm:$0xf]
        %v172 = vld [vmem:[%s168 + $0x8] sm:$0xf]
        %v173 = vld [vmem:[%s168 + $0xc] sm:$0xf]
        %v174 = vld [vmem:[%s168 + $0x10] sm:$0xf]
        %v175 = vld [vmem:[%s168 + $0x14] sm:$0xf]
        %v176 = vld [vmem:[%s168 + $0x18] sm:$0xf]
        %v177 = vld [vmem:[%s168 + $0x1c] sm:$0xf]
        %v178 = vld [vmem:[%s168 + $0x20] sm:$0xf]
        %v179 = vld [vmem:[%s168 + $0x24] sm:$0xf]
        %v180 = vld [vmem:[%s168 + $0x28] sm:$0xf]
        %v181 = vld [vmem:[%s168 + $0x2c] sm:$0xf]
        %v182 = vld [vmem:[%s168 + $0x30] sm:$0xf]
        %v183 = vld [vmem:[%s168 + $0x34] sm:$0xf]
        %v184 = vld [vmem:[%s168 + $0x38] sm:$0xf]
        %v185 = vld [vmem:[%s168 + $0x3c] sm:$0xf]
        %v186 = vld [vmem:[%s168 + $0x40] sm:$0xf]
        %v187 = vld [vmem:[%s168 + $0x44] sm:$0xf]
        %v188 = vld [vmem:[%s168 + $0x48] sm:$0xf]
        %v189 = vld [vmem:[%s168 + $0x4c] sm:$0xf]
        %v190 = vld [vmem:[%s168 + $0x50] sm:$0xf]
        %v191 = vld [vmem:[%s168 + $0x54] sm:$0xf]
        %v192 = vld [vmem:[%s168 + $0x58] sm:$0xf]
        %v193 = vld [vmem:[%s168 + $0x5c] sm:$0xf]
        %v194 = vld [vmem:[%s168 + $0x60] sm:$0xf]
        %v195 = vld [vmem:[%s168 + $0x64] sm:$0xf]
        %v196 = vld [vmem:[%s168 + $0x68] sm:$0xf]
        %v197 = vld [vmem:[%s168 + $0x6c] sm:$0xf]
        %v198 = vld [vmem:[%s168 + $0x70] sm:$0xf]
        %v199 = vld [vmem:[%s168 + $0x74] sm:$0xf]
        %v200 = vld [vmem:[%s168 + $0x78] sm:$0xf]
        %v201 = vld [vmem:[%s168 + $0x7c] sm:$0xf]
        %v202 = vld [vmem:[%s1] sm:$0xf]
        %v203 = vld [vmem:[%s1 + $0x4] sm:$0xf]
        %v204 = vld [vmem:[%s1 + $0x8] sm:$0xf]
        %v205 = vld [vmem:[%s1 + $0xc] sm:$0xf]
        %v206 = vld [vmem:[%s1 + $0x10] sm:$0xf]
        %v207 = vld [vmem:[%s1 + $0x14] sm:$0xf]
        %v240 = vunpack.c.l.b16 %v170
        %v241 = vunpack.c.l.b16 %v171
        %v242 = vunpack.c.l.b16 %v172
        %v243 = vunpack.c.l.b16 %v173
        %v244 = vunpack.c.l.b16 %v174
        %v245 = vunpack.c.l.b16 %v175
        %v246 = vunpack.c.l.b16 %v176
        %v247 = vunpack.c.l.b16 %v177
        %v248 = vunpack.c.l.b16 %v178
        %v249 = vunpack.c.l.b16 %v179
        %v250 = vunpack.c.l.b16 %v180
        %v251 = vunpack.c.l.b16 %v181
        %v252 = vunpack.c.l.b16 %v182
        %v253 = vunpack.c.l.b16 %v183
        %v254 = vunpack.c.l.b16 %v184
        %v255 = vunpack.c.l.b16 %v185
        %v256 = vunpack.c.l.b16 %v186
        %v257 = vunpack.c.l.b16 %v187
        %v258 = vunpack.c.l.b16 %v188
        %v259 = vunpack.c.l.b16 %v189
        %v260 = vunpack.c.l.b16 %v190
        %v261 = vunpack.c.l.b16 %v191
        %v262 = vunpack.c.l.b16 %v192
        %v263 = vunpack.c.l.b16 %v193
        %v264 = vunpack.c.l.b16 %v194
        %v265 = vunpack.c.l.b16 %v195
        %v266 = vunpack.c.l.b16 %v196
        %v267 = vunpack.c.l.b16 %v197
        %v268 = vunpack.c.l.b16 %v198
        %v269 = vunpack.c.l.b16 %v199
        %v270 = vunpack.c.l.b16 %v200
        %v271 = vunpack.c.l.b16 %v201
        %v272 = vpack.c.b16 %v241, %v240
        %v273 = vpack.c.b16 %v243, %v242
        %v274 = vpack.c.b16 %v245, %v244
        %v275 = vpack.c.b16 %v247, %v246
        %v276 = vpack.c.b16 %v249, %v248
        %v277 = vpack.c.b16 %v251, %v250
        %v278 = vpack.c.b16 %v253, %v252
        %v279 = vpack.c.b16 %v255, %v254
        %v280 = vpack.c.b16 %v257, %v256
        %v281 = vpack.c.b16 %v259, %v258
        %v282 = vpack.c.b16 %v261, %v260
        %v283 = vpack.c.b16 %v263, %v262
        %v284 = vpack.c.b16 %v265, %v264
        %v285 = vpack.c.b16 %v267, %v266
        %v286 = vpack.c.b16 %v269, %v268
        %v287 = vpack.c.b16 %v271, %v270
        %v294 = vunpack.c.l.b16 %v202
        %v295 = vunpack.c.l.b16 %v203
        %v296 = vunpack.c.l.b16 %v204
        %v297 = vunpack.c.l.b16 %v205
        %v298 = vunpack.c.l.b16 %v206
        %v299 = vunpack.c.l.b16 %v207
        %v300 = vpack.c.b16 %v295, %v294
        %v301 = vpack.c.b16 %v297, %v296
        %v302 = vpack.c.b16 %v299, %v298
        %vm306 = vcmask 392192
        %v308 = vsel %vm306, %v272, 0
        %v311 = vsel %vm306, %v273, 0
        %v314 = vsel %vm306, %v274, 0
        %v317 = vsel %vm306, %v275, 0
        %v320 = vsel %vm306, %v276, 0
        %v323 = vsel %vm306, %v277, 0
        %v326 = vsel %vm306, %v278, 0
        %v329 = vsel %vm306, %v279, 0
        %v332 = vsel %vm306, %v280, 0
        %v335 = vsel %vm306, %v281, 0
        %v338 = vsel %vm306, %v282, 0
        %v341 = vsel %vm306, %v283, 0
        %v344 = vsel %vm306, %v284, 0
        %v347 = vsel %vm306, %v285, 0
        %v350 = vsel %vm306, %v286, 0
        %v353 = vsel %vm306, %v287, 0
        %355 = vmatprep.subr.bf16.mxu0 0
        %356 = vmatpush1.bf16.msra.mxu0 %v300
        %357 = vmatprep.subr.bf16.mxu0 0
        %358 = vmatpush1.bf16.msra.mxu0 %v301
        %359 = vmatprep.subr.bf16.mxu0 0
        %360 = vmatpush1.bf16.msra.mxu0 %v302
        %361 = vmatprep.subr.bf16.mxu0 0
        %362 = vmatpush1.bf16.msra.mxu0 0
        %363 = vmatprep.subr.bf16.mxu0 0
        %364 = vmatpush1.bf16.msra.mxu0 0
        %365 = vmatprep.subr.bf16.mxu0 0
        %366 = vmatpush1.bf16.msra.mxu0 0
        %367 = vmatprep.subr.bf16.mxu0 0
        %368 = vmatpush1.bf16.msra.mxu0 0
        %369 = vmatprep.subr.bf16.mxu0 0
        %370 = vmatpush1.bf16.msra.mxu0 0
        %371 = vmatprep.subr.bf16.mxu0 0
        %372 = vmatpush1.bf16.msra.mxu0 0
        %373 = vmatprep.subr.bf16.mxu0 0
        %374 = vmatpush1.bf16.msra.mxu0 0
        %375 = vmatprep.subr.bf16.mxu0 0
        %376 = vmatpush1.bf16.msra.mxu0 0
        %377 = vmatprep.subr.bf16.mxu0 0
        %378 = vmatpush1.bf16.msra.mxu0 0
        %379 = vmatprep.subr.bf16.mxu0 0
        %380 = vmatpush1.bf16.msra.mxu0 0
        %381 = vmatprep.subr.bf16.mxu0 0
        %382 = vmatpush1.bf16.msra.mxu0 0
        %383 = vmatprep.subr.bf16.mxu0 0
        %384 = vmatpush1.bf16.msra.mxu0 0
        %385 = vmatprep.subr.bf16.mxu0 0
        %386 = vmatpush1.bf16.msra.mxu0 0
        %387 = vmatprep.mubr.bf16.mxu0 0
        %388 = vmatmul.mubr.bf16.gmra.mrb[0].mxu0 %v308
        %v389 = vpop.f32.mrb[0].mxu0
        %v390 = vadd.f32 0.0, %v389
        %v391 = vpop.f32.mrb[0].mxu0
        %v392 = vpop.f32.mrb[0].mxu0
        %v393 = vadd.f32 0.0, %v392
        %v394 = vpop.f32.mrb[0].mxu0
        %395 = vmatprep.mubr.bf16.mxu0 0
        %396 = vmatmul.mubr.bf16.gmra.mrb[0].mxu0 %v311
        %v397 = vpop.f32.mrb[0].mxu0
        %v398 = vadd.f32 0.0, %v397
        %v399 = vpop.f32.mrb[0].mxu0
        %v400 = vpop.f32.mrb[0].mxu0
        %v401 = vadd.f32 0.0, %v400
        %v402 = vpop.f32.mrb[0].mxu0
        %403 = vmatprep.mubr.bf16.mxu0 0
        %404 = vmatmul.mubr.bf16.gmra.mrb[0].mxu0 %v314
        %v405 = vpop.f32.mrb[0].mxu0
        %v406 = vadd.f32 0.0, %v405
        %v407 = vpop.f32.mrb[0].mxu0
        %v408 = vpop.f32.mrb[0].mxu0
        %v409 = vadd.f32 0.0, %v408
        %v410 = vpop.f32.mrb[0].mxu0
        %411 = vmatprep.mubr.bf16.mxu0 0
        %412 = vmatmul.mubr.bf16.gmra.mrb[0].mxu0 %v317
        %v413 = vpop.f32.mrb[0].mxu0
        %v414 = vadd.f32 0.0, %v413
        %v415 = vpop.f32.mrb[0].mxu0
        %v416 = vpop.f32.mrb[0].mxu0
        %v417 = vadd.f32 0.0, %v416
        %v418 = vpop.f32.mrb[0].mxu0
        %419 = vmatprep.mubr.bf16.mxu0 0
        %420 = vmatmul.mubr.bf16.gmra.mrb[0].mxu0 %v320
        %v421 = vpop.f32.mrb[0].mxu0
        %v422 = vadd.f32 0.0, %v421
        %v423 = vpop.f32.mrb[0].mxu0
        %v424 = vpop.f32.mrb[0].mxu0
        %v425 = vadd.f32 0.0, %v424
        %v426 = vpop.f32.mrb[0].mxu0
        %427 = vmatprep.mubr.bf16.mxu0 0
        %428 = vmatmul.mubr.bf16.gmra.mrb[0].mxu0 %v323
        %v429 = vpop.f32.mrb[0].mxu0
        %v430 = vadd.f32 0.0, %v429
        %v431 = vpop.f32.mrb[0].mxu0
        %v432 = vpop.f32.mrb[0].mxu0
        %v433 = vadd.f32 0.0, %v432
        %v434 = vpop.f32.mrb[0].mxu0
        %435 = vmatprep.mubr.bf16.mxu0 0
        %436 = vmatmul.mubr.bf16.gmra.mrb[0].mxu0 %v326
        %v437 = vpop.f32.mrb[0].mxu0
        %v438 = vadd.f32 0.0, %v437
        %v439 = vpop.f32.mrb[0].mxu0
        %v440 = vpop.f32.mrb[0].mxu0
        %v441 = vadd.f32 0.0, %v440
        %v442 = vpop.f32.mrb[0].mxu0
        %443 = vmatprep.mubr.bf16.mxu0 0
        %444 = vmatmul.mubr.bf16.gmra.mrb[0].mxu0 %v329
        %v445 = vpop.f32.mrb[0].mxu0
        %v446 = vadd.f32 0.0, %v445
        %v447 = vpop.f32.mrb[0].mxu0
        %v448 = vpop.f32.mrb[0].mxu0
        %v449 = vadd.f32 0.0, %v448
        %v450 = vpop.f32.mrb[0].mxu0
        %451 = vmatprep.mubr.bf16.mxu0 0
        %452 = vmatmul.mubr.bf16.gmra.mrb[0].mxu0 %v332
        %v453 = vpop.f32.mrb[0].mxu0
        %v454 = vadd.f32 0.0, %v453
        %v455 = vpop.f32.mrb[0].mxu0
        %v456 = vpop.f32.mrb[0].mxu0
        %v457 = vadd.f32 0.0, %v456
        %v458 = vpop.f32.mrb[0].mxu0
        %459 = vmatprep.mubr.bf16.mxu0 0
        %460 = vmatmul.mubr.bf16.gmra.mrb[0].mxu0 %v335
        %v461 = vpop.f32.mrb[0].mxu0
        %v462 = vadd.f32 0.0, %v461
        %v463 = vpop.f32.mrb[0].mxu0
        %v464 = vpop.f32.mrb[0].mxu0
        %v465 = vadd.f32 0.0, %v464
        %v466 = vpop.f32.mrb[0].mxu0
        %467 = vmatprep.mubr.bf16.mxu0 0
        %468 = vmatmul.mubr.bf16.gmra.mrb[0].mxu0 %v338
        %v469 = vpop.f32.mrb[0].mxu0
        %v470 = vadd.f32 0.0, %v469
        %v471 = vpop.f32.mrb[0].mxu0
        %v472 = vpop.f32.mrb[0].mxu0
        %v473 = vadd.f32 0.0, %v472
        %v474 = vpop.f32.mrb[0].mxu0
        %475 = vmatprep.mubr.bf16.mxu0 0
        %476 = vmatmul.mubr.bf16.gmra.mrb[0].mxu0 %v341
        %v477 = vpop.f32.mrb[0].mxu0
        %v478 = vadd.f32 0.0, %v477
        %v479 = vpop.f32.mrb[0].mxu0
        %v480 = vpop.f32.mrb[0].mxu0
        %v481 = vadd.f32 0.0, %v480
        %v482 = vpop.f32.mrb[0].mxu0
        %483 = vmatprep.mubr.bf16.mxu0 0
        %484 = vmatmul.mubr.bf16.gmra.mrb[0].mxu0 %v344
        %v485 = vpop.f32.mrb[0].mxu0
        %v486 = vadd.f32 0.0, %v485
        %v487 = vpop.f32.mrb[0].mxu0
        %v488 = vpop.f32.mrb[0].mxu0
        %v489 = vadd.f32 0.0, %v488
        %v490 = vpop.f32.mrb[0].mxu0
        %491 = vmatprep.mubr.bf16.mxu0 0
        %492 = vmatmul.mubr.bf16.gmra.mrb[0].mxu0 %v347
        %v493 = vpop.f32.mrb[0].mxu0
        %v494 = vadd.f32 0.0, %v493
        %v495 = vpop.f32.mrb[0].mxu0
        %v496 = vpop.f32.mrb[0].mxu0
        %v497 = vadd.f32 0.0, %v496
        %v498 = vpop.f32.mrb[0].mxu0
        %499 = vmatprep.mubr.bf16.mxu0 0
        %500 = vmatmul.mubr.bf16.gmra.mrb[0].mxu0 %v350
        %v501 = vpop.f32.mrb[0].mxu0
        %v502 = vadd.f32 0.0, %v501
        %v503 = vpop.f32.mrb[0].mxu0
        %v504 = vpop.f32.mrb[0].mxu0
        %v505 = vadd.f32 0.0, %v504
        %v506 = vpop.f32.mrb[0].mxu0
        %507 = vmatprep.mubr.bf16.mxu0 0
        %508 = vmatmul.mubr.bf16.gmra.mrb[0].mxu0 %v353
        %v509 = vpop.f32.mrb[0].mxu0
        %v510 = vadd.f32 0.0, %v509
        %v511 = vpop.f32.mrb[0].mxu0
        %v512 = vpop.f32.mrb[0].mxu0
        %v513 = vadd.f32 0.0, %v512
        %v514 = vpop.f32.mrb[0].mxu0
        %515 = vdwg.mxu0
        %v516 = vmax.f32 %v390, %v454
        %v517 = vmax.f32 %v393, %v457
        %v518 = vmax.f32 %v398, %v462
        %v519 = vmax.f32 %v401, %v465
        %v520 = vmax.f32 %v406, %v470
        %v521 = vmax.f32 %v409, %v473
        %v522 = vmax.f32 %v414, %v478
        %v523 = vmax.f32 %v417, %v481
        %v524 = vmax.f32 %v422, %v486
        %v525 = vmax.f32 %v425, %v489
        %v526 = vmax.f32 %v430, %v494
        %v527 = vmax.f32 %v433, %v497
        %v528 = vmax.f32 %v438, %v502
        %v529 = vmax.f32 %v441, %v505
        %v530 = vmax.f32 %v446, %v510
        %v531 = vmax.f32 %v449, %v513
        %v532 = vmax.f32 %v516, %v517
        %v533 = vmax.f32 %v518, %v519
        %v534 = vmax.f32 %v520, %v521
        %v535 = vmax.f32 %v522, %v523
        %v536 = vmax.f32 %v524, %v525
        %v537 = vmax.f32 %v526, %v527
        %v538 = vmax.f32 %v528, %v529
        %v539 = vmax.f32 %v530, %v531
        %v540 = vld [vmem:[%s2] sm:$0x1]
        %v542 = vlaneseq
        %v543 = vshrl.u32 %v542, 7
        %v544 = vsub.s32 0, %v543
        %v545 = vrot.slane %v540, %v544
        %v547 = vadd.f32 %v532, %v545
        %v548 = vadd.f32 %v533, %v545
        %v549 = vadd.f32 %v534, %v545
        %v550 = vadd.f32 %v535, %v545
        %v551 = vadd.f32 %v536, %v545
        %v552 = vadd.f32 %v537, %v545
        %v553 = vadd.f32 %v538, %v545
        %v554 = vadd.f32 %v539, %v545
        %v555 = vmax.f32 %v547, 0.0
        %v556 = vmax.f32 %v548, 0.0
        %v557 = vmax.f32 %v549, 0.0
        %v558 = vmax.f32 %v550, 0.0
        %v559 = vmax.f32 %v551, 0.0
        %v560 = vmax.f32 %v552, 0.0
        %v561 = vmax.f32 %v553, 0.0
        %v562 = vmax.f32 %v554, 0.0
        %vm563 = vcmask 64512
        %564 = vst.msk [vmem:[%s163] sm:$0xff] %vm563, %v555
        %565 = vst.msk [vmem:[%s163 + $0x8] sm:$0xff] %vm563, %v556
        %566 = vst.msk [vmem:[%s163 + $0x10] sm:$0xff] %vm563, %v557
        %567 = vst.msk [vmem:[%s163 + $0x18] sm:$0xff] %vm563, %v558
        %568 = vst.msk [vmem:[%s163 + $0x20] sm:$0xff] %vm563, %v559
        %569 = vst.msk [vmem:[%s163 + $0x28] sm:$0xff] %vm563, %v560
        %570 = vst.msk [vmem:[%s163 + $0x30] sm:$0xff] %vm563, %v561
        %571 = vst.msk [vmem:[%s163 + $0x38] sm:$0xff] %vm563, %v562
        %s572 = sand.u32 %s93, 1
        %s573 = scalar_lea.sflag [#allocation3], %s572
        %s574 = sand.u32 %s93, 1
        %s575 = smul.addr %s574, 64
        %s576 = scalar_lea.vmem [#allocation2], %s575
        // Predicated region
        $region33: #{tpu_custom_call.1} parent=31 // pred_check
          %p577 = pneg %p103
        $region34: #{tpu_custom_call.1} parent=31 // pred_check_branch
          %579 = sbr.rel (%p577) target = $region36
        $region35: #{tpu_custom_call.1} parent=31 // pred_region
          %s581 = ssub.s32 1024, 1024
          %582 = vsyncadd %s573, %s581
          %s583 = smul.addr %s17, 8
          %s584 = smul.addr %s583, 128
          %s585 = scalar_lea.hbm %s3, %s584
          %s586 = sshll.u32 %s576, 4
          %s587 = int_to_ptr.vmem [resolvable:$true] %s586
          %592 = dma.vmem_to_hbm [thread:$0]  %s587, 1024, %s585, %s573, 128, 128, 8
        $region36: #{tpu_custom_call.1} parent=31 // pred_fallthru
          _
      $region32: #{tpu_custom_call.1} parent=5 // pred_fallthru
        _
      %p593 = scmp.le.s32.totalorder 2, %s12
      // Predicated region
      $region37: #{tpu_custom_call.1} parent=5 // pred_check
        %p594 = pneg %p593
      $region38: #{tpu_custom_call.1} parent=5 // pred_check_branch
        %596 = sbr.rel (%p594) target = $region40
      $region39: #{tpu_custom_call.1} parent=5 // pred_region
        %s597 = ssub.s32 %s12, 2
        // Predicated region
        $region41: #{tpu_custom_call.1} parent=39 // pred_check
          %p598 = pneg %p109
        $region42: #{tpu_custom_call.1} parent=39 // pred_check_branch
          %600 = sbr.rel (%p598) target = $region44
        $region43: #{tpu_custom_call.1} parent=39 // pred_region
          %s601 = sand.u32 %s94, 1
          %s602 = scalar_lea.sflag [#allocation3], %s601
          %s603 = sand.u32 %s94, 1
          %s604 = smul.addr %s603, 64
          %s605 = scalar_lea.vmem [#allocation2], %s604
          %606 = dma.done %s602, 1024
        $region44: #{tpu_custom_call.1} parent=39 // pred_fallthru
          _
      $region40: #{tpu_custom_call.1} parent=5 // pred_fallthru
        _
    $region6: #{tpu_custom_call.1} parent=1 // loop_footer
      %s16 = sadd.s32 1, %s12
    $region7: #{tpu_custom_call.1} parent=1 // loop_footer_branch
      %11 = sbr.rel target = $region3
    $region8: #{tpu_custom_call.1} parent=1 // loop_exit
      _
    %607 = vsyncpa [#allocation3], 1
    %s608 = scalar_lea.sflag [#allocation3], 1
    %609 = vsyncpa %s608, 1

</llo_original>
